<compile_context>
chip_gen: v6e
topology: v6e:2x2x1
jax: 0.10.0
libtpu: 0.0.40
codegen_flags: <defaults>
</compile_context>

<pallas_src>
import functools

import jax
import jax.numpy as jnp
from jax.experimental import pallas as pl
from jax.experimental.pallas import tpu as pltpu

_LANE = 128
_BF16_SUBLANE = 16          # bf16 packs 2 rows per 8-sublane vreg row
_NEG_BIG = -1e30            # finite "minus infinity" for padded softmax lanes


def _round_up(x, m):
    return ((x + m - 1) // m) * m


def _mlp_softmax_kernel(x_ref, w1_ref, b1_ref, w2_ref, b2_ref, out_ref):
    # x_ref:  [bt, I]    bf16, unpadded feature dim (MXU handles K=I)
    # w1_ref: [I, Hp]    bf16;  b1_ref: [1, Hp] f32 (padded lanes = 0)
    # w2_ref: [Hp, Op]   bf16;  b2_ref: [1, Op] f32 (padded lanes = -1e30)
    # out_ref:[bt, Op]   bf16 by default, lane-dense
    x = x_ref[...]

    # Linear(I, H) + ReLU.  f32 accumulation on the MXU, f32 epilogue.
    h = jnp.dot(x, w1_ref[...], preferred_element_type=jnp.float32) + b1_ref[...]
    h = jnp.maximum(h, 0.0)

    # Linear(H, O).  Activations go back to bf16 for the second MXU pass;
    # zero-padded hidden lanes contribute exactly 0 to this dot.
    logits = (
        jnp.dot(h.astype(w2_ref.dtype), w2_ref[...],
                preferred_element_type=jnp.float32)
        + b2_ref[...]
    )

    # Numerically-stable softmax over the feature axis.  Padded output lanes
    # carry a -1e30 bias, so exp() maps them to exactly 0 and they do not
    # perturb the denominator.
    m = jnp.max(logits, axis=-1, keepdims=True)
    e = jnp.exp(logits - m)
    denom = jnp.sum(e, axis=-1, keepdims=True)
    out_ref[...] = (e * pl.reciprocal(denom, approx=True)).astype(out_ref.dtype)


def pad_params(w1, b1, w2, b2, mxu_dtype=jnp.bfloat16):
    """One-time (offline) parameter prep: lane-pad H/O + cast weights to bf16.

    Weights are stored as [in_features, out_features] (transpose of PyTorch's
    nn.Linear weight).  The input feature dim I is left unpadded (the x tile
    keeps a full-extent last dim).  Biases stay f32 (epilogue dtype); padded
    output lanes get a -1e30 bias so the fused softmax gives them exactly 0.
    """
    I, H = w1.shape
    H2, O = w2.shape
    assert H == H2
    Hp, Op = _round_up(H, _LANE), _round_up(O, _LANE)

    w1p = jnp.zeros((I, Hp), mxu_dtype).at[:, :H].set(w1.astype(mxu_dtype))
    b1p = jnp.zeros((1, Hp), jnp.float32).at[:, :H].set(
        b1.reshape(1, H).astype(jnp.float32))
    w2p = jnp.zeros((Hp, Op), mxu_dtype).at[:H, :O].set(w2.astype(mxu_dtype))
    b2p = jnp.full((1, Op), _NEG_BIG, jnp.float32).at[:, :O].set(
        b2.reshape(1, O).astype(jnp.float32))
    return w1p, b1p, w2p, b2p


@functools.partial(jax.jit,
                   static_argnames=("output_size", "batch_tile", "out_dtype"))
def fully_connected_output_forward(x, w1p, b1p, w2p, b2p, *, output_size,
                                   batch_tile=2048, out_dtype=jnp.bfloat16):
    """y = softmax(relu(x @ W1 + b1) @ W2 + b2, axis=1)   (inference path)."""
    B, I = x.shape
    assert w1p.shape[0] == I, "x feature dim must match W1"
    Hp = w1p.shape[1]
    Op = w2p.shape[1]

    # Cast x to the MXU dtype; feature dim stays unpadded (full-extent block).
    xp = x.astype(w1p.dtype)

    # Batch tiling:
    #  * multiples of 16 (bf16 sublane packing),
    #  * at least 2 grid steps when the batch allows it, so v7x's two
    #    TensorCores both get work under dimension_semantics=("parallel",),
    #  * up to `batch_tile` rows per step to amortize per-step overhead.
    B16 = _round_up(B, _BF16_SUBLANE)
    half = _round_up(pl.cdiv(B16, 2), _BF16_SUBLANE)
    bt = max(_BF16_SUBLANE,
             min(_round_up(batch_tile, _BF16_SUBLANE), half))
    Bp = _round_up(B, bt)
    if Bp != B:
        xp = jnp.pad(xp, ((0, Bp - B), (0, 0)))
    grid = (Bp // bt,)

    nbytes = lambda a: a.size * a.dtype.itemsize
    out_itemsize = jnp.dtype(out_dtype).itemsize
    cost = pl.CostEstimate(
        flops=2 * Bp * (I * Hp + Hp * Op),
        transcendentals=Bp * Op,
        bytes_accessed=(nbytes(xp) + nbytes(w1p) + nbytes(b1p)
                        + nbytes(w2p) + nbytes(b2p) + Bp * Op * out_itemsize),
    )

    out = pl.pallas_call(
        _mlp_softmax_kernel,
        out_shape=jax.ShapeDtypeStruct((Bp, Op), out_dtype),
        grid_spec=pltpu.PrefetchScalarGridSpec(
            num_scalar_prefetch=0,
            grid=grid,
            in_specs=[
                pl.BlockSpec((bt, I), lambda i: (i, 0)),   # x tile (streamed)
                pl.BlockSpec((I, Hp), lambda i: (0, 0)),   # W1 (grid-invariant)
                pl.BlockSpec((1, Hp), lambda i: (0, 0)),   # b1
                pl.BlockSpec((Hp, Op), lambda i: (0, 0)),  # W2 (grid-invariant)
                pl.BlockSpec((1, Op), lambda i: (0, 0)),   # b2
            ],
            out_specs=pl.BlockSpec((bt, Op), lambda i: (i, 0)),  # lane-dense
        ),
        compiler_params=pltpu.CompilerParams(
            # Batch axis is embarrassingly parallel -> shards across v7x's two
            # TensorCores; measured-neutral on single-TC v5e/v6e.
            dimension_semantics=("parallel",),
            # Default scoped-VMEM limit is plenty: worst-case footprint at
            # bt=2048 is ~1.5 MiB double-buffered.
        ),
        cost_estimate=cost,
    )(xp, w1p, b1p, w2p, b2p)

    # Strip batch padding and padded output lanes.
    return out[:B, :output_size]


def _reference_forward(x, w1, b1, w2, b2):
    h = jnp.maximum(x @ w1 + b1, 0.0)
    logits = h @ w2 + b2
    return jax.nn.softmax(logits, axis=1)


if __name__ == "__main__":
    # FullyConnectedOutput(input_size=32, output_size=16, layer_units=(10,),
    # nonlin=ReLU, hidden_dropout=0, output_nonlin=Softmax(dim=1)),
    # inference path (labels=None, labels_groups=None).
    input_size, hidden, output_size, batch = 32, 10, 16, 20

    key = jax.random.PRNGKey(0)
    kx, kw1, kb1, kw2, kb2 = jax.random.split(key, 5)
    x = jax.random.normal(kx, (batch, input_size), dtype=jnp.float32)
    w1 = jax.random.normal(kw1, (input_size, hidden), dtype=jnp.float32) * 0.1
    b1 = jax.random.normal(kb1, (1, hidden), dtype=jnp.float32) * 0.1
    w2 = jax.random.normal(kw2, (hidden, output_size), dtype=jnp.float32) * 0.1
    b2 = jax.random.normal(kb2, (1, output_size), dtype=jnp.float32) * 0.1

    w1p, b1p, w2p, b2p = pad_params(w1, b1, w2, b2)
    out = fully_connected_output_forward(
        x, w1p, b1p, w2p, b2p, output_size=output_size, batch_tile=2048)
    out = jax.block_until_ready(out)

    ref = _reference_forward(x, w1, b1, w2, b2)
    assert out.shape == (batch, output_size)
    out_f32 = out.astype(jnp.float32)
    # bf16 MXU inputs, bf16 output store and approx reciprocal -> loosened
    # tolerance vs the f32 reference.
    assert jnp.allclose(out_f32, ref, atol=3e-2, rtol=3e-2), "mismatch vs reference"
    # Softmax rows sum to ~1 (approx reciprocal + bf16).
    assert jnp.allclose(jnp.sum(out_f32, axis=1), 1.0, atol=2e-2)

    # TODO(synk): training path (CrossEntropyLoss, labels / labels_groups
    # per-group softmax and masking) is not part of the inference hot path and
    # is left out.
    print("KERNEL_OK")
</pallas_src>

<mosaic_0001>
module attributes {stable_mosaic.version = 11 : i64} {
  func.func @_mlp_softmax_kernel(%arg0: i32, %arg1: memref<16x32xbf16, #tpu.memory_space<vmem>>, %arg2: memref<32x128xbf16, #tpu.memory_space<vmem>>, %arg3: memref<1x128xf32, #tpu.memory_space<vmem>>, %arg4: memref<128x128xbf16, #tpu.memory_space<vmem>>, %arg5: memref<1x128xf32, #tpu.memory_space<vmem>>, %arg6: memref<16x128xbf16, #tpu.memory_space<vmem>>) attributes {dimension_semantics = [#tpu.dimension_semantics<parallel>], iteration_bounds = array<i64: 2>, scalar_prefetch = 0 : i64, scratch_operands = 0 : i64, tpu.core_type = #tpu.core_type<tc>, window_params = [{transform_indices = @transform_0, window_bounds = array<i64: 16, 32>}, {pipeline_mode = #tpu.pipeline_mode<synchronous>, transform_indices = @transform_1, window_bounds = array<i64: 32, 128>}, {pipeline_mode = #tpu.pipeline_mode<synchronous>, transform_indices = @transform_2, window_bounds = array<i64: 1, 128>}, {pipeline_mode = #tpu.pipeline_mode<synchronous>, transform_indices = @transform_3, window_bounds = array<i64: 128, 128>}, {pipeline_mode = #tpu.pipeline_mode<synchronous>, transform_indices = @transform_4, window_bounds = array<i64: 1, 128>}, {transform_indices = @transform_5, window_bounds = array<i64: 16, 128>}]} {
    %c0 = arith.constant 0 : index
    %c0_0 = arith.constant 0 : index
    %0 = vector.load %arg1[%c0, %c0_0] : memref<16x32xbf16, #tpu.memory_space<vmem>>, vector<16x32xbf16>
    %c0_1 = arith.constant 0 : index
    %c0_2 = arith.constant 0 : index
    %1 = vector.load %arg2[%c0_1, %c0_2] : memref<32x128xbf16, #tpu.memory_space<vmem>>, vector<32x128xbf16>
    %cst = arith.constant dense<0.000000e+00> : vector<16x128xf32>
    %2 = tpu.matmul %0, %1, %cst {dimension_numbers = #tpu.dot_dimension_numbers<[1], [0], [0], [1], [0, 0, 1, 1], [], []>} : vector<16x32xbf16>, vector<32x128xbf16>, vector<16x128xf32> -> vector<16x128xf32>
    %c0_3 = arith.constant 0 : index
    %c0_4 = arith.constant 0 : index
    %3 = vector.load %arg3[%c0_3, %c0_4] : memref<1x128xf32, #tpu.memory_space<vmem>>, vector<1x128xf32>
    %4 = vector.broadcast %3 : vector<1x128xf32> to vector<16x128xf32>
    %5 = arith.addf %2, %4 : vector<16x128xf32>
    %cst_5 = arith.constant 0.000000e+00 : f32
    %6 = vector.broadcast %cst_5 : f32 to vector<16x128xf32>
    %7 = arith.maximumf %5, %6 : vector<16x128xf32>
    %8 = arith.truncf %7 : vector<16x128xf32> to vector<16x128xbf16>
    %c0_6 = arith.constant 0 : index
    %c0_7 = arith.constant 0 : index
    %9 = vector.load %arg4[%c0_6, %c0_7] : memref<128x128xbf16, #tpu.memory_space<vmem>>, vector<128x128xbf16>
    %cst_8 = arith.constant dense<0.000000e+00> : vector<16x128xf32>
    %10 = tpu.matmul %8, %9, %cst_8 {dimension_numbers = #tpu.dot_dimension_numbers<[1], [0], [0], [1], [0, 0, 1, 1], [], []>} : vector<16x128xbf16>, vector<128x128xbf16>, vector<16x128xf32> -> vector<16x128xf32>
    %c0_9 = arith.constant 0 : index
    %c0_10 = arith.constant 0 : index
    %11 = vector.load %arg5[%c0_9, %c0_10] : memref<1x128xf32, #tpu.memory_space<vmem>>, vector<1x128xf32>
    %12 = vector.broadcast %11 : vector<1x128xf32> to vector<16x128xf32>
    %13 = arith.addf %10, %12 : vector<16x128xf32>
    %cst_11 = arith.constant dense<0xFF800000> : vector<16xf32>
    %14 = vector.multi_reduction <maximumf>, %13, %cst_11 [1] : vector<16x128xf32> to vector<16xf32>
    %15 = vector.shape_cast %14 : vector<16xf32> to vector<16x1xf32>
    %16 = vector.broadcast %15 : vector<16x1xf32> to vector<16x128xf32>
    %17 = arith.subf %13, %16 : vector<16x128xf32>
    %18 = math.exp %17 : vector<16x128xf32>
    %cst_12 = arith.constant dense<0.000000e+00> : vector<16xf32>
    %19 = vector.multi_reduction <add>, %18, %cst_12 [1] : vector<16x128xf32> to vector<16xf32>
    %20 = vector.shape_cast %19 : vector<16xf32> to vector<16x1xf32>
    %21 = tpu.reciprocal %20 {approx = true} : vector<16x1xf32> -> vector<16x1xf32>
    %22 = vector.broadcast %21 : vector<16x1xf32> to vector<16x128xf32>
    %23 = arith.mulf %18, %22 : vector<16x128xf32>
    %24 = arith.truncf %23 : vector<16x128xf32> to vector<16x128xbf16>
    %c0_13 = arith.constant 0 : index
    %c0_14 = arith.constant 0 : index
    %25 = vector.load %arg6[%c0_13, %c0_14] : memref<16x128xbf16, #tpu.memory_space<vmem>>, vector<16x128xbf16>
    tpu.vector_store %arg6[%c0_13, %c0_14], %24 {strides = array<i32>} : memref<16x128xbf16, #tpu.memory_space<vmem>>, vector<16x128xbf16>,
    return
  }
  func.func @transform_0(%arg0: i32) -> (i32, i32) {
    %c0_i32 = arith.constant 0 : i32
    %c0_i32_0 = arith.constant 0 : i32
    return %arg0, %c0_i32 : i32, i32
  }
  func.func @transform_1(%arg0: i32) -> (i32, i32) {
    %c0_i32 = arith.constant 0 : i32
    %c0_i32_0 = arith.constant 0 : i32
    %c0_i32_1 = arith.constant 0 : i32
    return %c0_i32, %c0_i32_0 : i32, i32
  }
  func.func @transform_2(%arg0: i32) -> (i32, i32) {
    %c0_i32 = arith.constant 0 : i32
    %c0_i32_0 = arith.constant 0 : i32
    %c0_i32_1 = arith.constant 0 : i32
    return %c0_i32, %c0_i32_0 : i32, i32
  }
  func.func @transform_3(%arg0: i32) -> (i32, i32) {
    %c0_i32 = arith.constant 0 : i32
    %c0_i32_0 = arith.constant 0 : i32
    %c0_i32_1 = arith.constant 0 : i32
    return %c0_i32, %c0_i32_0 : i32, i32
  }
  func.func @transform_4(%arg0: i32) -> (i32, i32) {
    %c0_i32 = arith.constant 0 : i32
    %c0_i32_0 = arith.constant 0 : i32
    %c0_i32_1 = arith.constant 0 : i32
    return %c0_i32, %c0_i32_0 : i32, i32
  }
  func.func @transform_5(%arg0: i32) -> (i32, i32) {
    %c0_i32 = arith.constant 0 : i32
    %c0_i32_0 = arith.constant 0 : i32
    return %arg0, %c0_i32 : i32, i32
  }
}

</mosaic_0001>

<llo_original>
// kernel: fully_connected_output_forward.1
$region0: #{fully_connected_output_forward.1}
  #allocation0 [shape = 'u32[]', space=smem, size = 0x4, offset = 0x4, fixed_abs, tag = 'smem constant byte address 0x4 - core index']
  #allocation1 [shape = 'u32[144,128]{1,0:T(1,128)}', space=vmem, size = 0x12000, scoped, tag = 'internal scratch']
  %s0 = inlined_call_operand.vmem [shape: bf16[32,32], index: 0, kind: input, shape index: {}]
  %s1 = inlined_call_operand.hbm [shape: bf16[32,128], index: 1, kind: input, shape index: {}]
  %s2 = inlined_call_operand.vmem [shape: f32[1,128], index: 2, kind: input, shape index: {}]
  %s3 = inlined_call_operand.vmem [shape: bf16[128,128], index: 3, kind: input, shape index: {}]
  %s4 = inlined_call_operand.vmem [shape: f32[1,128], index: 4, kind: input, shape index: {}]
  %s5 = inlined_call_operand.vmem [shape: bf16[32,128], index: 5, kind: output, shape index: {}]
  %s6 = sld [smem:[#allocation0]]
  $region57: #{fully_connected_output_forward.1} parent=0
    _
  %s8 = ssub.s32 1, %s6
  %s9 = scalar_select 0, %s8, %s6
  $region1: #{fully_connected_output_forward.1} parent=0
    #allocation2 [shape = 'u8[8192]{0}', space=vmem, size = 0x2000, scoped, tag = 'input window, operand 1, single buffered']
    #allocation3 [shape = 's32[2]{0}', space=sflag, size = 0x8, scoped, tag = 'scoped memory for fully_connected_output_forward.1']
    %10 = vsyncpa [#allocation3], 0
    loop: start=0, step=1, limit=4
    $region2: #{fully_connected_output_forward.1} parent=1 // loop_pre_header
      _
    $region3: #{fully_connected_output_forward.1} parent=1 // loop_header
      %s12 = sphi 0, %s16
      %p13 = scmp.ge.s32.totalorder %s12, 4
      %s22 = sphi 0, %s24
      %s25 = sphi 0, %s22
      %s26 = sphi 0, %s25
      %s42 = sphi 0, %s26
      %s46 = sphi 0, %s46
      %s48 = sphi 0, %s46
      %s49 = sphi 0, %s48
      %s63 = sphi 0, %s49
      %s67 = sphi 0, %s67
      %s69 = sphi 0, %s67
      %s70 = sphi 0, %s69
      %s84 = sphi 0, %s70
      %s88 = sphi 0, %s88
      %s90 = sphi 0, %s88
      %s91 = sphi 0, %s90
      %s105 = sphi 0, %s91
      %s109 = sphi 0, %s109
      %s111 = sphi 0, %s109
      %s112 = sphi 0, %s111
      %s126 = sphi 0, %s112
      %s132 = sphi 0, %s134
      %s135 = sphi 0, %s132
      %s136 = sphi 0, %s135
      %s152 = sphi 0, %s136
    $region4: #{fully_connected_output_forward.1} parent=1 // loop_header_branch
      %15 = sbr.rel (%p13) target = $region8
    $region5: #{fully_connected_output_forward.1} parent=1 // loop_body
      %s17 = ssub.s32 %s12, 1
      %s18 = ssub.s32 %s12, 2
      %s19 = sadd.s32 %s12, 1
      %s20 = ssub.s32 %s12, %s19
      %p21 = scmp.eq.s32.totalorder %s20, 0
      %s23 = sadd.s32 %s22, 1
      %s24 = scalar_select %p21, %s22, %s23
      %p27 = pneg %p21
      %p28 = scmp.eq.s32.totalorder %s12, 1
      %p29 = por %p27, %p28
      %p30 = scmp.ne.s32.totalorder %s22, %s25
      %p31 = scmp.eq.s32.totalorder %s12, 0
      %p32 = por %p30, %p31
      %p33 = scmp.ne.s32.totalorder %s22, %s25
      %p34 = scmp.eq.s32.totalorder %s17, 1
      %p35 = por %p33, %p34
      %p36 = scmp.ne.s32.totalorder %s25, %s26
      %p37 = scmp.eq.s32.totalorder %s17, 0
      %p38 = por %p36, %p37
      %p39 = scmp.ne.s32.totalorder %s25, %s26
      %p40 = scmp.eq.s32.totalorder %s18, 1
      %p41 = por %p39, %p40
      %p43 = scmp.ne.s32.totalorder %s26, %s42
      %p44 = scmp.eq.s32.totalorder %s18, 0
      %p45 = por %p43, %p44
      %s47 = sadd.s32 %s46, 1
      %p50 = scmp.eq.s32.totalorder %s12, 1
      %p51 = scmp.ne.s32.totalorder %s46, %s48
      %p52 = scmp.eq.s32.totalorder %s12, 0
      %p53 = por %p51, %p52
      %p54 = scmp.ne.s32.totalorder %s46, %s48
      %p55 = scmp.eq.s32.totalorder %s17, 1
      %p56 = por %p54, %p55
      %p57 = scmp.ne.s32.totalorder %s48, %s49
      %p58 = scmp.eq.s32.totalorder %s17, 0
      %p59 = por %p57, %p58
      %p60 = scmp.ne.s32.totalorder %s48, %s49
      %p61 = scmp.eq.s32.totalorder %s18, 1
      %p62 = por %p60, %p61
      %p64 = scmp.ne.s32.totalorder %s49, %s63
      %p65 = scmp.eq.s32.totalorder %s18, 0
      %p66 = por %p64, %p65
      %s68 = sadd.s32 %s67, 1
      %p71 = scmp.eq.s32.totalorder %s12, 1
      %p72 = scmp.ne.s32.totalorder %s67, %s69
      %p73 = scmp.eq.s32.totalorder %s12, 0
      %p74 = por %p72, %p73
      %p75 = scmp.ne.s32.totalorder %s67, %s69
      %p76 = scmp.eq.s32.totalorder %s17, 1
      %p77 = por %p75, %p76
      %p78 = scmp.ne.s32.totalorder %s69, %s70
      %p79 = scmp.eq.s32.totalorder %s17, 0
      %p80 = por %p78, %p79
      %p81 = scmp.ne.s32.totalorder %s69, %s70
      %p82 = scmp.eq.s32.totalorder %s18, 1
      %p83 = por %p81, %p82
      %p85 = scmp.ne.s32.totalorder %s70, %s84
      %p86 = scmp.eq.s32.totalorder %s18, 0
      %p87 = por %p85, %p86
      %s89 = sadd.s32 %s88, 1
      %p92 = scmp.eq.s32.totalorder %s12, 1
      %p93 = scmp.ne.s32.totalorder %s88, %s90
      %p94 = scmp.eq.s32.totalorder %s12, 0
      %p95 = por %p93, %p94
      %p96 = scmp.ne.s32.totalorder %s88, %s90
      %p97 = scmp.eq.s32.totalorder %s17, 1
      %p98 = por %p96, %p97
      %p99 = scmp.ne.s32.totalorder %s90, %s91
      %p100 = scmp.eq.s32.totalorder %s17, 0
      %p101 = por %p99, %p100
      %p102 = scmp.ne.s32.totalorder %s90, %s91
      %p103 = scmp.eq.s32.totalorder %s18, 1
      %p104 = por %p102, %p103
      %p106 = scmp.ne.s32.totalorder %s91, %s105
      %p107 = scmp.eq.s32.totalorder %s18, 0
      %p108 = por %p106, %p107
      %s110 = sadd.s32 %s109, 1
      %p113 = scmp.eq.s32.totalorder %s12, 1
      %p114 = scmp.ne.s32.totalorder %s109, %s111
      %p115 = scmp.eq.s32.totalorder %s12, 0
      %p116 = por %p114, %p115
      %p117 = scmp.ne.s32.totalorder %s109, %s111
      %p118 = scmp.eq.s32.totalorder %s17, 1
      %p119 = por %p117, %p118
      %p120 = scmp.ne.s32.totalorder %s111, %s112
      %p121 = scmp.eq.s32.totalorder %s17, 0
      %p122 = por %p120, %p121
      %p123 = scmp.ne.s32.totalorder %s111, %s112
      %p124 = scmp.eq.s32.totalorder %s18, 1
      %p125 = por %p123, %p124
      %p127 = scmp.ne.s32.totalorder %s112, %s126
      %p128 = scmp.eq.s32.totalorder %s18, 0
      %p129 = por %p127, %p128
      %s130 = ssub.s32 %s12, %s19
      %p131 = scmp.eq.s32.totalorder %s130, 0
      %s133 = sadd.s32 %s132, 1
      %s134 = scalar_select %p131, %s132, %s133
      %p137 = pneg %p131
      %p138 = scmp.eq.s32.totalorder %s12, 1
      %p139 = por %p137, %p138
      %p140 = scmp.ne.s32.totalorder %s132, %s135
      %p141 = scmp.eq.s32.totalorder %s12, 0
      %p142 = por %p140, %p141
      %p143 = scmp.ne.s32.totalorder %s132, %s135
      %p144 = scmp.eq.s32.totalorder %s17, 1
      %p145 = por %p143, %p144
      %p146 = scmp.ne.s32.totalorder %s135, %s136
      %p147 = scmp.eq.s32.totalorder %s17, 0
      %p148 = por %p146, %p147
      %p149 = scmp.ne.s32.totalorder %s135, %s136
      %p150 = scmp.eq.s32.totalorder %s18, 1
      %p151 = por %p149, %p150
      %p153 = scmp.ne.s32.totalorder %s136, %s152
      %p154 = scmp.eq.s32.totalorder %s18, 0
      %p155 = por %p153, %p154
      %p156 = scmp.le.s32.totalorder 1, %s12
      %p157 = scmp.lt.s32.totalorder %s12, 3
      %p158 = pnand %p156, %p157
      %p159 = pneg %p158
      // Predicated region
      $region9: #{fully_connected_output_forward.1} parent=5 // pred_check
        _
      $region10: #{fully_connected_output_forward.1} parent=5 // pred_check_branch
        %161 = sbr.rel (%p158) target = $region12
      $region11: #{fully_connected_output_forward.1} parent=5 // pred_region
        %s162 = ssub.s32 %s12, 1
        // Predicated region
        $region13: #{fully_connected_output_forward.1} parent=11 // pred_check
          %p163 = pneg %p59
        $region14: #{fully_connected_output_forward.1} parent=11 // pred_check_branch
          %165 = sbr.rel (%p163) target = $region16
        $region15: #{fully_connected_output_forward.1} parent=11 // pred_region
          %s167 = ssub.s32 256, 256
          %168 = vsyncadd [#allocation3], %s167
          %s169 = sshll.u32 [#allocation2], 4
          %s170 = int_to_ptr.vmem [resolvable:$true] %s169
          %175 = dma.hbm_to_vmem [thread:$0]  %s1, 256, %s170, [#allocation3], 64, 64, 4
        $region16: #{fully_connected_output_forward.1} parent=11 // pred_fallthru
          _
        // Predicated region
        $region17: #{fully_connected_output_forward.1} parent=11 // pred_check
          %p176 = pneg %p80
        $region18: #{fully_connected_output_forward.1} parent=11 // pred_check_branch
          %178 = sbr.rel (%p176) target = $region20
        $region19: #{fully_connected_output_forward.1} parent=11 // pred_region
          _
        $region20: #{fully_connected_output_forward.1} parent=11 // pred_fallthru
          _
        // Predicated region
        $region21: #{fully_connected_output_forward.1} parent=11 // pred_check
          %p179 = pneg %p101
        $region22: #{fully_connected_output_forward.1} parent=11 // pred_check_branch
          %181 = sbr.rel (%p179) target = $region24
        $region23: #{fully_connected_output_forward.1} parent=11 // pred_region
          _
        $region24: #{fully_connected_output_forward.1} parent=11 // pred_fallthru
          _
        // Predicated region
        $region25: #{fully_connected_output_forward.1} parent=11 // pred_check
          %p182 = pneg %p122
        $region26: #{fully_connected_output_forward.1} parent=11 // pred_check_branch
          %184 = sbr.rel (%p182) target = $region28
        $region27: #{fully_connected_output_forward.1} parent=11 // pred_region
          _
        $region28: #{fully_connected_output_forward.1} parent=11 // pred_fallthru
          _
      $region12: #{fully_connected_output_forward.1} parent=5 // pred_fallthru
        _
      %p185 = scmp.lt.s32.totalorder %s12, 2
      // Predicated region
      $region29: #{fully_connected_output_forward.1} parent=5 // pred_check
        %p186 = pneg %p185
      $region30: #{fully_connected_output_forward.1} parent=5 // pred_check_branch
        %188 = sbr.rel (%p186) target = $region32
      $region31: #{fully_connected_output_forward.1} parent=5 // pred_region
        // Predicated region
        $region33: #{fully_connected_output_forward.1} parent=31 // pred_check
          %p189 = pneg %p32
        $region34: #{fully_connected_output_forward.1} parent=31 // pred_check_branch
          %191 = sbr.rel (%p189) target = $region36
        $region35: #{fully_connected_output_forward.1} parent=31 // pred_region
          %s192 = smul.u32 2, %s12
          %p193 = scmp.lt.s32.totalorder %s192, 3
          %s194 = scalar_select %p193, %s192, 3
          %s195 = smul.addr %s194, 4
          %s196 = scalar_lea.vmem %s0, %s195
          %s197 = smul.u32 2, %s12
        $region36: #{fully_connected_output_forward.1} parent=31 // pred_fallthru
          _
      $region32: #{fully_connected_output_forward.1} parent=5 // pred_fallthru
        _
      %p198 = scmp.le.s32.totalorder 1, %s12
      %p199 = scmp.lt.s32.totalorder %s12, 3
      %p200 = pnand %p198, %p199
      %p201 = pneg %p200
      // Predicated region
      $region37: #{fully_connected_output_forward.1} parent=5 // pred_check
        _
      $region38: #{fully_connected_output_forward.1} parent=5 // pred_check_branch
        %203 = sbr.rel (%p200) target = $region40
      $region39: #{fully_connected_output_forward.1} parent=5 // pred_region
        %s204 = ssub.s32 %s12, 1
        // Predicated region
        $region41: #{fully_connected_output_forward.1} parent=39 // pred_check
          %p205 = pneg %p59
        $region42: #{fully_connected_output_forward.1} parent=39 // pred_check_branch
          %207 = sbr.rel (%p205) target = $region44
        $region43: #{fully_connected_output_forward.1} parent=39 // pred_region
          %208 = dma.done [#allocation3], 256
        $region44: #{fully_connected_output_forward.1} parent=39 // pred_fallthru
          _
        %s209 = smul.u32 2, %s17
        %p210 = scmp.lt.s32.totalorder %s209, 3
        %s211 = scalar_select %p210, %s209, 3
        %s212 = smul.addr %s211, 4
        %s213 = scalar_lea.vmem %s0, %s212
        %p214 = pneg %p38
        %p215 = pneg %p35
        %p216 = pneg %p59
        %p217 = pneg %p56
        %p218 = pneg %p80
        %p219 = pneg %p77
        %p220 = pneg %p101
        %p221 = pneg %p98
        %p222 = pneg %p122
        %p223 = pneg %p119
        %p224 = pneg %p148
        %p225 = pneg %p145
        %s226 = smul.u32 2, %s17
        %p227 = scmp.lt.s32.totalorder %s226, 3
        %s228 = scalar_select %p227, %s226, 3
        %s229 = smul.addr %s228, 4
        %s230 = scalar_lea.vmem %s5, %s229
        %s231 = smul.u32 2, %s17
        %p232 = scmp.lt.s32.totalorder %s231, 3
        %s233 = scalar_select %p232, %s231, 3
        %s234 = smul.addr %s233, 4
        %s235 = scalar_lea.vmem %s0, %s234
        %s236 = smul.u32 2, %s17
        %s237 = smul.u32 2, %s17
        %p238 = scmp.lt.s32.totalorder %s237, 3
        %s239 = scalar_select %p238, %s237, 3
        %s240 = smul.addr %s239, 4
        %s241 = scalar_lea.vmem %s5, %s240
        %s242 = smul.u32 2, %s17
        %v244 = vld [vmem:[%s235] sm:$0xf]
        %v245 = vld [vmem:[%s235 + $0x4] sm:$0xf]
        %v246 = vld [vmem:[#allocation2] sm:$0xf]
        %v247 = vld [vmem:[#allocation2 + $0x4] sm:$0xf]
        %v248 = vld [vmem:[#allocation2 + $0x8] sm:$0xf]
        %v249 = vld [vmem:[#allocation2 + $0xc] sm:$0xf]
        %v250 = vld [vmem:[%s2] sm:$0x1]
        %v252 = vlaneseq
        %v253 = vshrl.u32 %v252, 7
        %v254 = vsub.s32 0, %v253
        %v255 = vrot.slane %v250, %v254
        %v259 = vunpack.c.l.b16 %v244
        %v260 = vunpack.c.l.b16 %v245
        %v261 = vpack.c.b16 %v260, %v259
        %v266 = vunpack.c.l.b16 %v246
        %v267 = vunpack.c.l.b16 %v247
        %v268 = vunpack.c.l.b16 %v248
        %v269 = vunpack.c.l.b16 %v249
        %v270 = vpack.c.b16 %v267, %v266
        %v271 = vpack.c.b16 %v269, %v268
        %vm274 = vcmask 261120
        %v276 = vsel %vm274, %v261, 0
        %278 = vmatprep.subr.bf16.mxu0 0
        %279 = vmatpush1.bf16.msra.mxu0 0
        %280 = vmatprep.subr.bf16.mxu0 0
        %281 = vmatpush1.bf16.msra.mxu0 0
        %282 = vmatprep.subr.bf16.mxu0 0
        %283 = vmatpush1.bf16.msra.mxu0 0
        %284 = vmatprep.subr.bf16.mxu0 0
        %285 = vmatpush1.bf16.msra.mxu0 0
        %286 = vmatprep.subr.bf16.mxu0 0
        %287 = vmatpush1.bf16.msra.mxu0 0
        %288 = vmatprep.subr.bf16.mxu0 0
        %289 = vmatpush1.bf16.msra.mxu0 0
        %290 = vmatprep.subr.bf16.mxu0 0
        %291 = vmatpush1.bf16.msra.mxu0 %v271
        %292 = vmatprep.subr.bf16.mxu0 0
        %293 = vmatpush1.bf16.msra.mxu0 %v270
        %294 = vmatprep.subr.bf16.mxu0 0
        %295 = vmatpush2.bf16.msra.mxu0 0
        %296 = vmatprep.subr.bf16.mxu0 0
        %297 = vmatpush2.bf16.msra.mxu0 0
        %298 = vmatprep.subr.bf16.mxu0 0
        %299 = vmatpush2.bf16.msra.mxu0 0
        %300 = vmatprep.subr.bf16.mxu0 0
        %301 = vmatpush2.bf16.msra.mxu0 0
        %302 = vmatprep.subr.bf16.mxu0 0
        %303 = vmatpush2.bf16.msra.mxu0 0
        %304 = vmatprep.subr.bf16.mxu0 0
        %305 = vmatpush2.bf16.msra.mxu0 0
        %306 = vmatprep.subr.bf16.mxu0 0
        %307 = vmatpush2.bf16.msra.mxu0 0
        %308 = vmatprep.subr.bf16.mxu0 0
        %309 = vmatpush2.bf16.msra.mxu0 0
        %310 = vmatprep.mubr.bf16.mxu0 0
        %311 = vmatmul.mubr.bf16.gmra.mxu0 %v276
        %v312 = vpop.f32.mrf.mxu0
        %v313 = vadd.f32 %v255, %v312
        %v314 = vpop.f32.mrf.mxu0
        %v315 = vpop.f32.mrf.mxu0
        %v316 = vadd.f32 %v255, %v315
        %v317 = vpop.f32.mrf.mxu0
        %318 = vdwg.mxu0
        %v319 = vmax.f32 %v313, 0.0
        %v320 = vmax.f32 %v316, 0.0
        %v321 = vpack.c.bf16 %v320, %v319
        %v322 = vld [vmem:[%s3] sm:$0xf]
        %v323 = vld [vmem:[%s3 + $0x4] sm:$0xf]
        %v324 = vld [vmem:[%s3 + $0x8] sm:$0xf]
        %v325 = vld [vmem:[%s3 + $0xc] sm:$0xf]
        %v326 = vld [vmem:[%s3 + $0x10] sm:$0xf]
        %v327 = vld [vmem:[%s3 + $0x14] sm:$0xf]
        %v328 = vld [vmem:[%s3 + $0x18] sm:$0xf]
        %v329 = vld [vmem:[%s3 + $0x1c] sm:$0xf]
        %v330 = vld [vmem:[%s3 + $0x20] sm:$0xf]
        %v331 = vld [vmem:[%s3 + $0x24] sm:$0xf]
        %v332 = vld [vmem:[%s3 + $0x28] sm:$0xf]
        %v333 = vld [vmem:[%s3 + $0x2c] sm:$0xf]
        %v334 = vld [vmem:[%s3 + $0x30] sm:$0xf]
        %v335 = vld [vmem:[%s3 + $0x34] sm:$0xf]
        %v336 = vld [vmem:[%s3 + $0x38] sm:$0xf]
        %v337 = vld [vmem:[%s3 + $0x3c] sm:$0xf]
        %v338 = vld [vmem:[%s4] sm:$0x1]
        %v340 = vlaneseq
        %v341 = vshrl.u32 %v340, 7
        %v342 = vsub.s32 0, %v341
        %v343 = vrot.slane %v338, %v342
        %v361 = vunpack.c.l.b16 %v322
        %v362 = vunpack.c.l.b16 %v323
        %v363 = vunpack.c.l.b16 %v324
        %v364 = vunpack.c.l.b16 %v325
        %v365 = vunpack.c.l.b16 %v326
        %v366 = vunpack.c.l.b16 %v327
        %v367 = vunpack.c.l.b16 %v328
        %v368 = vunpack.c.l.b16 %v329
        %v369 = vunpack.c.l.b16 %v330
        %v370 = vunpack.c.l.b16 %v331
        %v371 = vunpack.c.l.b16 %v332
        %v372 = vunpack.c.l.b16 %v333
        %v373 = vunpack.c.l.b16 %v334
        %v374 = vunpack.c.l.b16 %v335
        %v375 = vunpack.c.l.b16 %v336
        %v376 = vunpack.c.l.b16 %v337
        %v377 = vpack.c.b16 %v362, %v361
        %v378 = vpack.c.b16 %v364, %v363
        %v379 = vpack.c.b16 %v366, %v365
        %v380 = vpack.c.b16 %v368, %v367
        %v381 = vpack.c.b16 %v370, %v369
        %v382 = vpack.c.b16 %v372, %v371
        %v383 = vpack.c.b16 %v374, %v373
        %v384 = vpack.c.b16 %v376, %v375
        %393 = vmatprep.subr.bf16.mxu0 0
        %394 = vmatpush1.bf16.msra.mxu0 %v384
        %395 = vmatprep.subr.bf16.mxu0 0
        %396 = vmatpush1.bf16.msra.mxu0 %v383
        %397 = vmatprep.subr.bf16.mxu0 0
        %398 = vmatpush1.bf16.msra.mxu0 %v382
        %399 = vmatprep.subr.bf16.mxu0 0
        %400 = vmatpush1.bf16.msra.mxu0 %v381
        %401 = vmatprep.subr.bf16.mxu0 0
        %402 = vmatpush1.bf16.msra.mxu0 %v380
        %403 = vmatprep.subr.bf16.mxu0 0
        %404 = vmatpush1.bf16.msra.mxu0 %v379
        %405 = vmatprep.subr.bf16.mxu0 0
        %406 = vmatpush1.bf16.msra.mxu0 %v378
        %407 = vmatprep.subr.bf16.mxu0 0
        %408 = vmatpush1.bf16.msra.mxu0 %v377
        %409 = vmatprep.subr.bf16.mxu0 0
        %410 = vmatpush2.bf16.msra.mxu0 0
        %411 = vmatprep.subr.bf16.mxu0 0
        %412 = vmatpush2.bf16.msra.mxu0 0
        %413 = vmatprep.subr.bf16.mxu0 0
        %414 = vmatpush2.bf16.msra.mxu0 0
        %415 = vmatprep.subr.bf16.mxu0 0
        %416 = vmatpush2.bf16.msra.mxu0 0
        %417 = vmatprep.subr.bf16.mxu0 0
        %418 = vmatpush2.bf16.msra.mxu0 0
        %419 = vmatprep.subr.bf16.mxu0 0
        %420 = vmatpush2.bf16.msra.mxu0 0
        %421 = vmatprep.subr.bf16.mxu0 0
        %422 = vmatpush2.bf16.msra.mxu0 0
        %423 = vmatprep.subr.bf16.mxu0 0
        %424 = vmatpush2.bf16.msra.mxu0 0
        %425 = vmatprep.mubr.bf16.mxu0 0
        %426 = vmatmul.mubr.bf16.gmra.mxu0 %v321
        %v427 = vpop.f32.mrf.mxu0
        %v428 = vadd.f32 %v343, %v427
        %v429 = vpop.f32.mrf.mxu0
        %v430 = vpop.f32.mrf.mxu0
        %v431 = vadd.f32 %v343, %v430
        %v432 = vpop.f32.mrf.mxu0
        %433 = vdwg.mxu0
        %434 = vmax.xlane.f32.xlu0 %v428
        %v435 = vpop.xlane.xlu0 %434
        %436 = vmax.xlane.f32.xlu0 %v431
        %v437 = vpop.xlane.xlu0 %436
        %v438 = vsub.f32 %v428, %v435
        %v439 = vsub.f32 %v431, %v437
        %v440 = vmul.f32 %v438, 1.442695
        %v441 = vpow.pop %v440
        %v442 = vmul.f32 %v439, 1.442695
        %v443 = vpow.pop %v442
        %444 = vadd.xlane.f32.xlu0 %v441
        %v445 = vpop.xlane.xlu0 %444
        %446 = vadd.xlane.f32.xlu0 %v443
        %v447 = vpop.xlane.xlu0 %446
        %v448 = vrcp.pop %v445
        %v449 = vrcp.pop %v447
        %v450 = vmul.f32 %v441, %v448
        %v451 = vmul.f32 %v443, %v449
        %v452 = vpack.c.bf16 %v451, %v450
        %v454 = vunpack.c.l.b16 %v452
        %v455 = vunpack.c.h.b16 %v452
        %v456 = vpack.c.b16 %v454, %v454
        %v457 = vpack.c.b16 %v455, %v455
        %460 = vst [vmem:[%s241] sm:$0xf] %v456
        %461 = vst [vmem:[%s241 + $0x4] sm:$0xf] %v457
        %s462 = smul.u32 2, %s17
        %p463 = scmp.lt.s32.totalorder %s462, 3
        %s464 = scalar_select %p463, %s462, 3
        %s465 = smul.addr %s464, 4
        %s466 = scalar_lea.vmem %s5, %s465
        // Predicated region
        $region45: #{fully_connected_output_forward.1} parent=39 // pred_check
          %p467 = pneg %p145
        $region46: #{fully_connected_output_forward.1} parent=39 // pred_check_branch
          %469 = sbr.rel (%p467) target = $region48
        $region47: #{fully_connected_output_forward.1} parent=39 // pred_region
          %s470 = smul.u32 2, %s17
        $region48: #{fully_connected_output_forward.1} parent=39 // pred_fallthru
          _
      $region40: #{fully_connected_output_forward.1} parent=5 // pred_fallthru
        _
      %p471 = scmp.le.s32.totalorder 2, %s12
      // Predicated region
      $region49: #{fully_connected_output_forward.1} parent=5 // pred_check
        %p472 = pneg %p471
      $region50: #{fully_connected_output_forward.1} parent=5 // pred_check_branch
        %474 = sbr.rel (%p472) target = $region52
      $region51: #{fully_connected_output_forward.1} parent=5 // pred_region
        %s475 = ssub.s32 %s12, 2
        // Predicated region
        $region53: #{fully_connected_output_forward.1} parent=51 // pred_check
          %p476 = pneg %p151
        $region54: #{fully_connected_output_forward.1} parent=51 // pred_check_branch
          %478 = sbr.rel (%p476) target = $region56
        $region55: #{fully_connected_output_forward.1} parent=51 // pred_region
          %s479 = smul.u32 2, %s18
          %p480 = scmp.lt.s32.totalorder %s479, 3
          %s481 = scalar_select %p480, %s479, 3
          %s482 = smul.addr %s481, 4
          %s483 = scalar_lea.vmem %s5, %s482
        $region56: #{fully_connected_output_forward.1} parent=51 // pred_fallthru
          _
      $region52: #{fully_connected_output_forward.1} parent=5 // pred_fallthru
        _
    $region6: #{fully_connected_output_forward.1} parent=1 // loop_footer
      %s16 = sadd.s32 1, %s12
    $region7: #{fully_connected_output_forward.1} parent=1 // loop_footer_branch
      %11 = sbr.rel target = $region3
    $region8: #{fully_connected_output_forward.1} parent=1 // loop_exit
      _
    %484 = vsyncpa [#allocation3], 1
    %s485 = scalar_lea.sflag [#allocation3], 1
    %486 = vsyncpa %s485, 1

</llo_original>
